<compile_context>
chip_gen: v7x
topology: tpu7x:2x2x1
jax: 0.10.0
libtpu: 0.0.40
codegen_flags: <defaults>
</compile_context>

<pallas_src>
import functools

import jax
import jax.numpy as jnp
import numpy as np
from jax import lax
from jax.experimental import pallas as pl
from jax.experimental.pallas import tpu as pltpu


_VMEM_LIMIT = 48 * 1024 * 1024  # fits v7x's 64 MiB physical VMEM with headroom


# ----------------------------------------------------------------------------
# Kernel 1: ConvTranspose2d(Cin, Cout, kernel_size=2, stride=2)
#   out[n, 2i+a, 2j+b, m] = sum_ci x[n, i, j, ci] * Wup[ci, m, a, b] + bup[m]
# The grid's last axis selects the output-row parity `a`; each step is one
# (T2*W2, Cin) x (Cin, 2*Cout) MXU matmul.  The HBM output is laid out as
# (N, H2, 2, W2, 2*Cout) so reshaping to (N, 2H2, 2W2, Cout) is a pure
# row-major collapse (free, no transpose).
# ----------------------------------------------------------------------------
def _deconv2x2_kernel(x_ref, w_ref, b_ref, o_ref):
    # x: (1, T2, W2, Cin)   w: (1, Cin, 2*Cout)   b: (1, 2*Cout)
    # o: (1, T2, 1, W2, 2*Cout)
    y = lax.dot_general(x_ref[0], w_ref[0], (((2,), (0,)), ((), ())),
                        preferred_element_type=jnp.float32)
    o_ref[0] = (y + b_ref[0])[:, None, :, :].astype(o_ref.dtype)


def deconv2x2(x_nhwc, w_torch, b, compute_dtype, row_tile=None):
    """ConvTranspose2d(k=2, s=2).  w_torch: (Cin, Cout, 2, 2) PyTorch layout."""
    N, H2, W2, Cin = x_nhwc.shape
    Cout = w_torch.shape[1]
    if row_tile is None:
        row_tile = H2
        if H2 > 128:
            for cand in (128, 64, 32, 16, 8, 4, 2, 1):
                if H2 % cand == 0:
                    row_tile = cand
                    break
    if H2 % row_tile != 0:
        raise ValueError(f"up_row_tile={row_tile} must divide H2={H2}")
    T2 = row_tile
    S2 = H2 // T2

    # W_r[a][ci, b*Cout + m] = w_torch[ci, m, a, b]
    w_r = jnp.transpose(w_torch, (2, 0, 3, 1)).reshape(2, Cin, 2 * Cout)
    w_r = w_r.astype(compute_dtype)
    b_r = jnp.tile(b, 2).reshape(1, 2 * Cout).astype(jnp.float32)

    out = pl.pallas_call(
        _deconv2x2_kernel,
        out_shape=jax.ShapeDtypeStruct((N, H2, 2, W2, 2 * Cout), compute_dtype),
        grid=(N, S2, 2),
        in_specs=[
            pl.BlockSpec((1, T2, W2, Cin), lambda n, s, a: (n, s, 0, 0)),
            pl.BlockSpec((1, Cin, 2 * Cout), lambda n, s, a: (a, 0, 0)),
            pl.BlockSpec((1, 2 * Cout), lambda n, s, a: (0, 0)),
        ],
        out_specs=pl.BlockSpec((1, T2, 1, W2, 2 * Cout),
                               lambda n, s, a: (n, s, a, 0, 0)),
        compiler_params=pltpu.CompilerParams(
            dimension_semantics=("parallel", "parallel", "arbitrary"),
            vmem_limit_bytes=_VMEM_LIMIT),
    )(x_nhwc, w_r, b_r)
    # Pure row-major collapse: (N, H2, 2, W2, 2*Cout) -> (N, 2H2, 2W2, Cout).
    return out.reshape(N, 2 * H2, 2 * W2, Cout)


# ----------------------------------------------------------------------------
# Kernel 2: fused  concat(x1, up) -> conv3x3+ReLU -> conv3x3+ReLU
# Tiled over (batch, row-strip).  Zero padding + channel concat are assembled
# only in VMEM: `xim[t, j, kx*Ccat + c]` holds the kx-shifted input so each ky
# tap is a single K=3*Ccat MXU matmul (and K=3*Cmid for conv2).
# ----------------------------------------------------------------------------
def _scatter_kx(dst, rows, src, group, c_off, W):
    """dst[rows, j, kx*group + c_off : +C] = src[:, j + kx - 1, :] (0 outside)."""
    C = src.shape[-1]
    spans = ((1, W, 0, W - 1), (0, W, 0, W), (0, W - 1, 1, W))
    for kx, (d0, d1, s0, s1) in enumerate(spans):
        dst[rows, d0:d1, kx * group + c_off:kx * group + c_off + C] = src[:, s0:s1, :]


def _fused_conv_kernel(x1m, x1t, x1b, upm, upt, upb, w1, b1, w2, b2, o_ref,
                       xim, h1im, acc1, acc2, *, TH, W, H, C1, Ccat, Cmid):
    s = pl.program_id(1)
    ns = pl.num_programs(1)

    # -- Stage 1: im2col-over-kx scratch for conv1 input (x1 ++ up channels) --
    # xim row t corresponds to image row (s*TH - 2 + t); invalid rows stay 0.
    xim[...] = jnp.zeros_like(xim)
    _scatter_kx(xim, slice(2, 2 + TH), x1m[0], Ccat, 0, W)
    _scatter_kx(xim, slice(2, 2 + TH), upm[0], Ccat, C1, W)

    @pl.when(s > 0)
    def _():
        _scatter_kx(xim, slice(0, 2), x1t[0], Ccat, 0, W)
        _scatter_kx(xim, slice(0, 2), upt[0], Ccat, C1, W)

    @pl.when(s < ns - 1)
    def _():
        _scatter_kx(xim, slice(TH + 2, TH + 4), x1b[0], Ccat, 0, W)
        _scatter_kx(xim, slice(TH + 2, TH + 4), upb[0], Ccat, C1, W)

    # -- Stage 2: conv1 (3x3, pad 1) + bias + ReLU over TH+2 rows --------------
    acc1[...] = jnp.zeros_like(acc1)
    for ky in range(3):
        patch = xim[ky:ky + TH + 2, :, :]                 # (TH+2, W, 3*Ccat)
        acc1[...] += lax.dot_general(patch, w1[ky], (((2,), (0,)), ((), ())),
                                     preferred_element_type=jnp.float32)
    h1 = jnp.maximum(acc1[...] + b1[0], 0.0)

    # h1 rows that fall outside the image act as conv2's zero padding.
    t = lax.broadcasted_iota(jnp.int32, (TH + 2, W, Cmid), 0)
    row = s * TH - 1 + t
    h1 = jnp.where((row >= 0) & (row < H), h1, 0.0).astype(xim.dtype)

    # -- Stage 3: im2col-over-kx scratch for conv2 -----------------------------
    h1im[...] = jnp.zeros_like(h1im)
    _scatter_kx(h1im, slice(0, TH + 2), h1, Cmid, 0, W)

    # -- Stage 4: conv2 (3x3, pad 1) + bias + ReLU -----------------------------
    acc2[...] = jnp.zeros_like(acc2)
    for ky in range(3):
        patch2 = h1im[ky:ky + TH, :, :]                   # (TH, W, 3*Cmid)
        acc2[...] += lax.dot_general(patch2, w2[ky], (((2,), (0,)), ((), ())),
                                     preferred_element_type=jnp.float32)
    o_ref[0] = jnp.maximum(acc2[...] + b2[0], 0.0).astype(o_ref.dtype)


def _pick_row_tile(H, requested):
    if requested is None:
        requested = H
        if H > 64:
            for cand in (64, 32, 16, 8, 4, 2):
                if H % cand == 0:
                    requested = cand
                    break
    if H % requested != 0 or requested % 2 != 0:
        raise ValueError(f"conv_row_tile={requested} must be even and divide H={H}")
    return requested


def fused_conv_block(x1, up, c1_w, c1_b, c2_w, c2_b, compute_dtype, row_tile=None):
    """unetConv2 (no batchnorm) with the channel concat fused in."""
    N, H, W, C1 = x1.shape
    Cu = up.shape[3]
    assert up.shape[:3] == (N, H, W)
    assert H % 2 == 0 and W >= 2, "fused conv kernel expects even H and W >= 2"
    Ccat = C1 + Cu
    Cmid = c1_w.shape[0]
    Co2 = c2_w.shape[0]
    assert c1_w.shape[1] == Ccat and c2_w.shape[1] == Cmid

    TH = _pick_row_tile(H, row_tile)
    S = H // TH

    # Weight slabs: row index = kx*Cin + ci  (matches the im2col channel order).
    w1 = jnp.transpose(c1_w, (2, 3, 1, 0)).reshape(3, 3 * Ccat, Cmid).astype(compute_dtype)
    w2 = jnp.transpose(c2_w, (2, 3, 1, 0)).reshape(3, 3 * Cmid, Co2).astype(compute_dtype)
    b1 = c1_b.reshape(1, Cmid).astype(jnp.float32)
    b2 = c2_b.reshape(1, Co2).astype(jnp.float32)

    kernel = functools.partial(_fused_conv_kernel, TH=TH, W=W, H=H,
                               C1=C1, Ccat=Ccat, Cmid=Cmid)

    hb = TH // 2            # halo block index stride (halo blocks are 2 rows)
    top_idx = lambda n, s: (n, jnp.maximum(s * hb - 1, 0), 0, 0)
    bot_idx = lambda n, s: (n, jnp.minimum(s * hb + hb, H // 2 - 1), 0, 0)

    return pl.pallas_call(
        kernel,
        out_shape=jax.ShapeDtypeStruct((N, H, W, Co2), jnp.float32),
        grid=(N, S),
        in_specs=[
            pl.BlockSpec((1, TH, W, C1), lambda n, s: (n, s, 0, 0)),
            pl.BlockSpec((1, 2, W, C1), top_idx),
            pl.BlockSpec((1, 2, W, C1), bot_idx),
            pl.BlockSpec((1, TH, W, Cu), lambda n, s: (n, s, 0, 0)),
            pl.BlockSpec((1, 2, W, Cu), top_idx),
            pl.BlockSpec((1, 2, W, Cu), bot_idx),
            pl.BlockSpec((3, 3 * Ccat, Cmid), lambda n, s: (0, 0, 0)),
            pl.BlockSpec((1, Cmid), lambda n, s: (0, 0)),
            pl.BlockSpec((3, 3 * Cmid, Co2), lambda n, s: (0, 0, 0)),
            pl.BlockSpec((1, Co2), lambda n, s: (0, 0)),
        ],
        out_specs=pl.BlockSpec((1, TH, W, Co2), lambda n, s: (n, s, 0, 0)),
        scratch_shapes=[
            pltpu.VMEM((TH + 4, W, 3 * Ccat), compute_dtype),
            pltpu.VMEM((TH + 2, W, 3 * Cmid), compute_dtype),
            pltpu.VMEM((TH + 2, W, Cmid), jnp.float32),
            pltpu.VMEM((TH, W, Co2), jnp.float32),
        ],
        compiler_params=pltpu.CompilerParams(
            dimension_semantics=("parallel", "parallel"),
            vmem_limit_bytes=_VMEM_LIMIT),
    )(x1, x1, x1, up, up, up, w1, b1, w2, b2)


# ----------------------------------------------------------------------------
# Bilinear resize with align_corners=True (matches F.interpolate).  Only used
# when the target size is NOT exactly 2x the deconv input (non-canonical case).
# TODO(synk): gather-heavy bilinear resampling stays in JAX glue, not Pallas.
# ----------------------------------------------------------------------------
def bilinear_align_corners(x_nhwc, out_h, out_w):
    N, H, W, C = x_nhwc.shape

    def coords(out_size, in_size):
        if out_size == 1:
            return jnp.zeros((1,), jnp.float32)
        return jnp.arange(out_size, dtype=jnp.float32) * ((in_size - 1) / (out_size - 1))

    ys, xs = coords(out_h, H), coords(out_w, W)
    y0 = jnp.clip(jnp.floor(ys).astype(jnp.int32), 0, H - 1)
    x0 = jnp.clip(jnp.floor(xs).astype(jnp.int32), 0, W - 1)
    y1 = jnp.minimum(y0 + 1, H - 1)
    x1 = jnp.minimum(x0 + 1, W - 1)
    wy = (ys - y0.astype(jnp.float32))[None, :, None, None]
    wx = (xs - x0.astype(jnp.float32))[None, None, :, None]
    g = lambda yi, xi: x_nhwc[:, yi][:, :, xi]
    top = g(y0, x0) * (1.0 - wx) + g(y0, x1) * wx
    bot = g(y1, x0) * (1.0 - wx) + g(y1, x1) * wx
    return top * (1.0 - wy) + bot * wy


# ----------------------------------------------------------------------------
# unetUp.forward (is_deconv=True):
#   up = ConvTranspose2d(inputs2); up = interpolate(up, size(inputs1),
#   bilinear, align_corners=True); return unetConv2(cat([inputs1, up], C))
# TODO(synk): the deconv itself could additionally be folded into the fused
# conv kernel (skipping the `up` HBM roundtrip entirely); left unfused here.
# ----------------------------------------------------------------------------
def unet_up_forward(params, inputs1_nchw, inputs2_nchw, *,
                    compute_dtype=jnp.bfloat16,
                    conv_row_tile=None, up_row_tile=None):
    cdt = compute_dtype
    x1 = jnp.transpose(inputs1_nchw, (0, 2, 3, 1)).astype(cdt)   # NCHW -> NHWC
    x2 = jnp.transpose(inputs2_nchw, (0, 2, 3, 1)).astype(cdt)

    up = deconv2x2(x2, params["up_w"], params["up_b"], cdt, row_tile=up_row_tile)
    H1, W1 = x1.shape[1], x1.shape[2]
    if up.shape[1:3] != (H1, W1):   # align_corners identity short-circuit
        up = bilinear_align_corners(up.astype(jnp.float32), H1, W1).astype(cdt)

    out = fused_conv_block(x1, up, params["c1_w"], params["c1_b"],
                           params["c2_w"], params["c2_b"], cdt,
                           row_tile=conv_row_tile)
    return jnp.transpose(out, (0, 3, 1, 2))                      # NHWC -> NCHW


# Pure-JAX reference (independent conv lowering, same bf16 cast points).
def unet_up_reference(params, inputs1_nchw, inputs2_nchw, compute_dtype=jnp.bfloat16):
    cdt = compute_dtype
    x1 = jnp.transpose(inputs1_nchw, (0, 2, 3, 1)).astype(cdt)
    x2 = jnp.transpose(inputs2_nchw, (0, 2, 3, 1)).astype(cdt)
    N, H2, W2, _ = x2.shape
    Cout = params["up_w"].shape[1]
    up = jnp.einsum("nhwi,iojk->nhjwko", x2, params["up_w"].astype(cdt),
                    preferred_element_type=jnp.float32)
    up = (up.reshape(N, 2 * H2, 2 * W2, Cout) + params["up_b"]).astype(cdt)
    if up.shape[1:3] != x1.shape[1:3]:
        up = bilinear_align_corners(up.astype(jnp.float32),
                                    x1.shape[1], x1.shape[2]).astype(cdt)
    cat = jnp.concatenate([x1, up], axis=-1)

    def conv_ref(x, w_torch, b):
        w_hwio = jnp.transpose(w_torch, (2, 3, 1, 0)).astype(cdt)
        y = lax.conv_general_dilated(x, w_hwio, (1, 1), "SAME",
                                     dimension_numbers=("NHWC", "HWIO", "NHWC"),
                                     preferred_element_type=jnp.float32)
        return jnp.maximum(y + b, 0.0)

    h = conv_ref(cat, params["c1_w"], params["c1_b"]).astype(cdt)
    h = conv_ref(h, params["c2_w"], params["c2_b"])
    return jnp.transpose(h, (0, 3, 1, 2))


if __name__ == "__main__":
    # unetUp(in_size=8, out_size=4, is_deconv=True)
    N, in_size, out_size = 2, 8, 4
    H2 = W2 = 8          # inputs2 spatial (deep/low-res feature map)
    H1 = W1 = 16         # inputs1 spatial (skip connection)

    key = jax.random.PRNGKey(0)
    k1, k2 = jax.random.split(key)
    inputs1 = jax.random.normal(k1, (N, out_size, H1, W1), jnp.float32)
    inputs2 = jax.random.normal(k2, (N, in_size, H2, W2), jnp.float32)

    pkey = jax.random.PRNGKey(42)
    ks = jax.random.split(pkey, 6)
    params = dict(
        up_w=0.1 * jax.random.normal(ks[0], (in_size, out_size, 2, 2), jnp.float32),
        up_b=0.1 * jax.random.normal(ks[1], (out_size,), jnp.float32),
        c1_w=0.1 * jax.random.normal(ks[2], (out_size, 2 * out_size, 3, 3), jnp.float32),
        c1_b=0.1 * jax.random.normal(ks[3], (out_size,), jnp.float32),
        c2_w=0.1 * jax.random.normal(ks[4], (out_size, out_size, 3, 3), jnp.float32),
        c2_b=0.1 * jax.random.normal(ks[5], (out_size,), jnp.float32),
    )

    # f32 path: tight check of the kernel logic; 2 row-strips exercise the
    # halo / boundary-masking code paths.
    out_f32 = jax.block_until_ready(unet_up_forward(
        params, inputs1, inputs2, compute_dtype=jnp.float32,
        conv_row_tile=8, up_row_tile=4))
    ref_f32 = jax.block_until_ready(unet_up_reference(
        params, inputs1, inputs2, compute_dtype=jnp.float32))
    assert out_f32.shape == (N, out_size, H1, W1), out_f32.shape
    np.testing.assert_allclose(np.asarray(out_f32), np.asarray(ref_f32),
                               atol=1e-3, rtol=1e-3)

    # bf16 path (default, MXU-friendly); same cast points as the reference.
    out_bf = jax.block_until_ready(unet_up_forward(
        params, inputs1, inputs2, conv_row_tile=8, up_row_tile=4))
    ref_bf = jax.block_until_ready(unet_up_reference(
        params, inputs1, inputs2, compute_dtype=jnp.bfloat16))
    assert out_bf.shape == (N, out_size, H1, W1), out_bf.shape
    np.testing.assert_allclose(np.asarray(out_bf), np.asarray(ref_bf),
                               atol=3e-2, rtol=3e-2)

    print("KERNEL_OK")
</pallas_src>

<mosaic_0001>
module attributes {stable_mosaic.version = 11 : i64} {
  func.func @_deconv2x2_kernel(%arg0: i32, %arg1: i32, %arg2: i32, %arg3: memref<1x4x8x8xf32, #tpu.memory_space<vmem>>, %arg4: memref<1x8x8xf32, #tpu.memory_space<vmem>>, %arg5: memref<1x8xf32, #tpu.memory_space<vmem>>, %arg6: memref<1x4x1x8x8xf32, #tpu.memory_space<vmem>>) attributes {dimension_semantics = [#tpu.dimension_semantics<parallel>, #tpu.dimension_semantics<parallel>, #tpu.dimension_semantics<arbitrary>], iteration_bounds = array<i64: 2, 2, 2>, scalar_prefetch = 0 : i64, scratch_operands = 0 : i64, tpu.core_type = #tpu.core_type<tc>, window_params = [{transform_indices = @transform_0, window_bounds = array<i64: 1, 4, 8, 8>}, {transform_indices = @transform_1, window_bounds = array<i64: 1, 8, 8>}, {pipeline_mode = #tpu.pipeline_mode<synchronous>, transform_indices = @transform_2, window_bounds = array<i64: 1, 8>}, {transform_indices = @transform_3, window_bounds = array<i64: 1, 4, 1, 8, 8>}]} {
    %c0 = arith.constant 0 : index
    %c0_0 = arith.constant 0 : index
    %c0_1 = arith.constant 0 : index
    %c0_2 = arith.constant 0 : index
    %0 = vector.load %arg3[%c0, %c0_0, %c0_1, %c0_2] : memref<1x4x8x8xf32, #tpu.memory_space<vmem>>, vector<1x4x8x8xf32>
    %1 = vector.shape_cast %0 : vector<1x4x8x8xf32> to vector<4x8x8xf32>
    %c0_3 = arith.constant 0 : index
    %c0_4 = arith.constant 0 : index
    %c0_5 = arith.constant 0 : index
    %2 = vector.load %arg4[%c0_3, %c0_4, %c0_5] : memref<1x8x8xf32, #tpu.memory_space<vmem>>, vector<1x8x8xf32>
    %3 = vector.shape_cast %2 : vector<1x8x8xf32> to vector<8x8xf32>
    %cst = arith.constant dense<0.000000e+00> : vector<4x8x8xf32>
    %4 = tpu.matmul %1, %3, %cst {dimension_numbers = #tpu.dot_dimension_numbers<[2], [0], [0, 1], [1], [0, 0, 0, 1, 1, 1], [], []>} : vector<4x8x8xf32>, vector<8x8xf32>, vector<4x8x8xf32> -> vector<4x8x8xf32>
    %c0_6 = arith.constant 0 : index
    %c0_7 = arith.constant 0 : index
    %5 = vector.load %arg5[%c0_6, %c0_7] : memref<1x8xf32, #tpu.memory_space<vmem>>, vector<1x8xf32>
    %6 = vector.shape_cast %5 : vector<1x8xf32> to vector<8xf32>
    %7 = vector.shape_cast %6 : vector<8xf32> to vector<1x1x8xf32>
    %8 = vector.broadcast %7 : vector<1x1x8xf32> to vector<4x8x8xf32>
    %9 = arith.addf %4, %8 : vector<4x8x8xf32>
    %10 = vector.shape_cast %9 : vector<4x8x8xf32> to vector<4x1x8x8xf32>
    %c0_8 = arith.constant 0 : index
    %c0_9 = arith.constant 0 : index
    %c0_10 = arith.constant 0 : index
    %c0_11 = arith.constant 0 : index
    %c0_12 = arith.constant 0 : index
    %11 = vector.load %arg6[%c0_8, %c0_9, %c0_10, %c0_11, %c0_12] : memref<1x4x1x8x8xf32, #tpu.memory_space<vmem>>, vector<1x4x1x8x8xf32>
    %12 = vector.shape_cast %11 : vector<1x4x1x8x8xf32> to vector<4x1x8x8xf32>
    %13 = vector.shape_cast %10 : vector<4x1x8x8xf32> to vector<1x4x1x8x8xf32>
    tpu.vector_store %arg6[%c0_8, %c0_9, %c0_10, %c0_11, %c0_12], %13 {strides = array<i32>} : memref<1x4x1x8x8xf32, #tpu.memory_space<vmem>>, vector<1x4x1x8x8xf32>,
    return
  }
  func.func @transform_0(%arg0: i32, %arg1: i32, %arg2: i32) -> (i32, i32, i32, i32) {
    %c0_i32 = arith.constant 0 : i32
    %c0_i32_0 = arith.constant 0 : i32
    %c0_i32_1 = arith.constant 0 : i32
    return %arg0, %arg1, %c0_i32, %c0_i32_0 : i32, i32, i32, i32
  }
  func.func @transform_1(%arg0: i32, %arg1: i32, %arg2: i32) -> (i32, i32, i32) {
    %c0_i32 = arith.constant 0 : i32
    %c0_i32_0 = arith.constant 0 : i32
    %c0_i32_1 = arith.constant 0 : i32
    return %arg2, %c0_i32, %c0_i32_0 : i32, i32, i32
  }
  func.func @transform_2(%arg0: i32, %arg1: i32, %arg2: i32) -> (i32, i32) {
    %c0_i32 = arith.constant 0 : i32
    %c0_i32_0 = arith.constant 0 : i32
    %c0_i32_1 = arith.constant 0 : i32
    return %c0_i32, %c0_i32_0 : i32, i32
  }
  func.func @transform_3(%arg0: i32, %arg1: i32, %arg2: i32) -> (i32, i32, i32, i32, i32) {
    %c0_i32 = arith.constant 0 : i32
    %c0_i32_0 = arith.constant 0 : i32
    %c0_i32_1 = arith.constant 0 : i32
    return %arg0, %arg1, %arg2, %c0_i32, %c0_i32_0 : i32, i32, i32, i32, i32
  }
}

</mosaic_0001>

<llo_original>
// kernel: tpu_custom_call.1
$region0: #{tpu_custom_call.1}
  #allocation0 [shape = 'u32[]', space=smem, size = 0x4, offset = 0x4, fixed_abs, tag = 'smem constant byte address 0x4 - core index']
  #allocation1 [shape = 'u32[144,128]{1,0:T(1,128)}', space=vmem, size = 0x12000, scoped, tag = 'internal scratch']
  %s0 = inlined_call_operand.hbm [shape: f32[2,8,8,8], index: 0, kind: input, shape index: {}]
  %s1 = inlined_call_operand.hbm [shape: f32[2,8,8], index: 1, kind: input, shape index: {}]
  %s2 = inlined_call_operand.vmem [shape: f32[1,8], index: 2, kind: input, shape index: {}]
  %s3 = inlined_call_operand.hbm [shape: f32[2,8,2,8,8], index: 3, kind: output, shape index: {}]
  %s4 = sld [smem:[#allocation0]]
  $region53: #{tpu_custom_call.1} parent=0
    _
  %s6 = ssub.s32 1, %s4
  %s7 = scalar_select 0, %s6, %s4
  $region1: #{tpu_custom_call.1} parent=0
    #allocation2 [shape = 'u8[32768]{0}', space=vmem, size = 0x8000, scoped, tag = 'input window, operand 0']
    #allocation3 [shape = 's32[2]{0}', space=sflag, size = 0x8, scoped, tag = 'scoped memory for tpu_custom_call.1']
    #allocation4 [shape = 's32[2]{0}', space=sflag, size = 0x8, scoped, tag = 'scoped memory for tpu_custom_call.1']
    #allocation5 [shape = 'u8[8192]{0}', space=vmem, size = 0x2000, scoped, tag = 'input window, operand 1']
    #allocation6 [shape = 's32[2]{0}', space=sflag, size = 0x8, scoped, tag = 'scoped memory for tpu_custom_call.1']
    #allocation7 [shape = 'u8[32768]{0}', space=vmem, size = 0x8000, scoped, tag = 'output window, operand 0']
    %8 = vsyncpa [#allocation3], 0
    %s9 = scalar_lea.sflag [#allocation3], 1
    %10 = vsyncpa %s9, 0
    %11 = vsyncpa [#allocation6], 0
    %s12 = scalar_lea.sflag [#allocation6], 1
    %13 = vsyncpa %s12, 0
    %14 = vsyncpa [#allocation4], 0
    %s15 = scalar_lea.sflag [#allocation4], 1
    %16 = vsyncpa %s15, 0
    loop: start=0, step=1, limit=10
    $region2: #{tpu_custom_call.1} parent=1 // loop_pre_header
      _
    $region3: #{tpu_custom_call.1} parent=1 // loop_header
      %s18 = sphi 0, %s22
      %p19 = scmp.ge.s32.totalorder %s18, 10
      %s25 = sphi 0, %s44
      %s26 = sphi 0, %s40
      %s27 = sphi 0, %s36
      %s28 = sphi 0, %s25
      %s29 = sphi 0, %s26
      %s30 = sphi 0, %s27
      %s31 = sphi 0, %s28
      %s32 = sphi 0, %s29
      %s33 = sphi 0, %s30
      %s49 = sphi 0, %s51
      %s52 = sphi 0, %s49
      %s53 = sphi 0, %s52
      %s69 = sphi 0, %s53
      %s75 = sphi 0, %s77
      %s78 = sphi 0, %s75
      %s79 = sphi 0, %s78
      %s95 = sphi 0, %s79
      %s99 = sphi 0, %s99
      %s101 = sphi 0, %s99
      %s102 = sphi 0, %s101
      %s116 = sphi 0, %s102
      %s126 = sphi 0, %s128
      %s129 = sphi 0, %s126
      %s130 = sphi 0, %s129
      %s146 = sphi 0, %s130
    $region4: #{tpu_custom_call.1} parent=1 // loop_header_branch
      %21 = sbr.rel (%p19) target = $region8
    $region5: #{tpu_custom_call.1} parent=1 // loop_body
      %s23 = ssub.s32 %s18, 1
      %s24 = ssub.s32 %s18, 2
      %s34 = sadd.s32 1, %s27
      %p35 = scmp.ge.s32.totalorder %s34, 2
      %s36 = scalar_select %p35, 0, %s34
      %s37 = sadd.s32 1, %s26
      %s38 = scalar_select %p35, %s37, %s26
      %p39 = scmp.ge.s32.totalorder %s38, 2
      %s40 = scalar_select %p39, 0, %s38
      %s41 = sadd.s32 1, %s25
      %s42 = scalar_select %p39, %s41, %s25
      %p43 = scmp.ge.s32.totalorder %s42, 2
      %s44 = scalar_select %p43, 0, %s42
      %s45 = ssub.s32 %s25, %s44
      %s46 = ssub.s32 %s26, %s40
      %s47 = sor.u32 %s45, %s46
      %p48 = scmp.eq.s32.totalorder %s47, 0
      %s50 = sadd.s32 %s49, 1
      %s51 = scalar_select %p48, %s49, %s50
      %p54 = pneg %p48
      %p55 = scmp.eq.s32.totalorder %s18, 7
      %p56 = por %p54, %p55
      %p57 = scmp.ne.s32.totalorder %s49, %s52
      %p58 = scmp.eq.s32.totalorder %s18, 0
      %p59 = por %p57, %p58
      %p60 = scmp.ne.s32.totalorder %s49, %s52
      %p61 = scmp.eq.s32.totalorder %s23, 7
      %p62 = por %p60, %p61
      %p63 = scmp.ne.s32.totalorder %s52, %s53
      %p64 = scmp.eq.s32.totalorder %s23, 0
      %p65 = por %p63, %p64
      %p66 = scmp.ne.s32.totalorder %s52, %s53
      %p67 = scmp.eq.s32.totalorder %s24, 7
      %p68 = por %p66, %p67
      %p70 = scmp.ne.s32.totalorder %s53, %s69
      %p71 = scmp.eq.s32.totalorder %s24, 0
      %p72 = por %p70, %p71
      %s73 = ssub.s32 %s27, %s36
      %p74 = scmp.eq.s32.totalorder %s73, 0
      %s76 = sadd.s32 %s75, 1
      %s77 = scalar_select %p74, %s75, %s76
      %p80 = pneg %p74
      %p81 = scmp.eq.s32.totalorder %s18, 7
      %p82 = por %p80, %p81
      %p83 = scmp.ne.s32.totalorder %s75, %s78
      %p84 = scmp.eq.s32.totalorder %s18, 0
      %p85 = por %p83, %p84
      %p86 = scmp.ne.s32.totalorder %s75, %s78
      %p87 = scmp.eq.s32.totalorder %s23, 7
      %p88 = por %p86, %p87
      %p89 = scmp.ne.s32.totalorder %s78, %s79
      %p90 = scmp.eq.s32.totalorder %s23, 0
      %p91 = por %p89, %p90
      %p92 = scmp.ne.s32.totalorder %s78, %s79
      %p93 = scmp.eq.s32.totalorder %s24, 7
      %p94 = por %p92, %p93
      %p96 = scmp.ne.s32.totalorder %s79, %s95
      %p97 = scmp.eq.s32.totalorder %s24, 0
      %p98 = por %p96, %p97
      %s100 = sadd.s32 %s99, 1
      %p103 = scmp.eq.s32.totalorder %s18, 7
      %p104 = scmp.ne.s32.totalorder %s99, %s101
      %p105 = scmp.eq.s32.totalorder %s18, 0
      %p106 = por %p104, %p105
      %p107 = scmp.ne.s32.totalorder %s99, %s101
      %p108 = scmp.eq.s32.totalorder %s23, 7
      %p109 = por %p107, %p108
      %p110 = scmp.ne.s32.totalorder %s101, %s102
      %p111 = scmp.eq.s32.totalorder %s23, 0
      %p112 = por %p110, %p111
      %p113 = scmp.ne.s32.totalorder %s101, %s102
      %p114 = scmp.eq.s32.totalorder %s24, 7
      %p115 = por %p113, %p114
      %p117 = scmp.ne.s32.totalorder %s102, %s116
      %p118 = scmp.eq.s32.totalorder %s24, 0
      %p119 = por %p117, %p118
      %s120 = ssub.s32 %s25, %s44
      %s121 = ssub.s32 %s26, %s40
      %s122 = sor.u32 %s120, %s121
      %s123 = ssub.s32 %s27, %s36
      %s124 = sor.u32 %s122, %s123
      %p125 = scmp.eq.s32.totalorder %s124, 0
      %s127 = sadd.s32 %s126, 1
      %s128 = scalar_select %p125, %s126, %s127
      %p131 = pneg %p125
      %p132 = scmp.eq.s32.totalorder %s18, 7
      %p133 = por %p131, %p132
      %p134 = scmp.ne.s32.totalorder %s126, %s129
      %p135 = scmp.eq.s32.totalorder %s18, 0
      %p136 = por %p134, %p135
      %p137 = scmp.ne.s32.totalorder %s126, %s129
      %p138 = scmp.eq.s32.totalorder %s23, 7
      %p139 = por %p137, %p138
      %p140 = scmp.ne.s32.totalorder %s129, %s130
      %p141 = scmp.eq.s32.totalorder %s23, 0
      %p142 = por %p140, %p141
      %p143 = scmp.ne.s32.totalorder %s129, %s130
      %p144 = scmp.eq.s32.totalorder %s24, 7
      %p145 = por %p143, %p144
      %p147 = scmp.ne.s32.totalorder %s130, %s146
      %p148 = scmp.eq.s32.totalorder %s24, 0
      %p149 = por %p147, %p148
      %p150 = scmp.le.s32.totalorder 1, %s18
      %p151 = scmp.lt.s32.totalorder %s18, 9
      %p152 = pnand %p150, %p151
      %p153 = pneg %p152
      // Predicated region
      $region9: #{tpu_custom_call.1} parent=5 // pred_check
        _
      $region10: #{tpu_custom_call.1} parent=5 // pred_check_branch
        %155 = sbr.rel (%p152) target = $region12
      $region11: #{tpu_custom_call.1} parent=5 // pred_region
        %s156 = ssub.s32 %s18, 1
        // Predicated region
        $region13: #{tpu_custom_call.1} parent=11 // pred_check
          %p157 = pneg %p112
        $region14: #{tpu_custom_call.1} parent=11 // pred_check_branch
          %159 = sbr.rel (%p157) target = $region16
        $region15: #{tpu_custom_call.1} parent=11 // pred_region
          _
        $region16: #{tpu_custom_call.1} parent=11 // pred_fallthru
          _
      $region12: #{tpu_custom_call.1} parent=5 // pred_fallthru
        _
      %p160 = scmp.lt.s32.totalorder %s18, 8
      // Predicated region
      $region17: #{tpu_custom_call.1} parent=5 // pred_check
        %p161 = pneg %p160
      $region18: #{tpu_custom_call.1} parent=5 // pred_check_branch
        %163 = sbr.rel (%p161) target = $region20
      $region19: #{tpu_custom_call.1} parent=5 // pred_region
        // Predicated region
        $region21: #{tpu_custom_call.1} parent=19 // pred_check
          %p164 = pneg %p59
        $region22: #{tpu_custom_call.1} parent=19 // pred_check_branch
          %166 = sbr.rel (%p164) target = $region24
        $region23: #{tpu_custom_call.1} parent=19 // pred_region
          %s167 = sand.u32 %s49, 1
          %s168 = scalar_lea.sflag [#allocation3], %s167
          %s169 = sand.u32 %s49, 1
          %s170 = smul.addr %s169, 32
          %s171 = scalar_lea.vmem [#allocation2], %s170
          %s172 = smul.u32 4, %s26
          %s174 = ssub.s32 512, 512
          %175 = vsyncadd %s168, %s174
          %s176 = smul.addr %s25, 8
          %s177 = sadd.s32 %s172, %s176
          %s178 = smul.addr %s177, 128
          %s179 = scalar_lea.hbm %s0, %s178
          %s180 = sshll.u32 %s171, 4
          %s181 = int_to_ptr.vmem [resolvable:$true] %s180
          %186 = dma.hbm_to_vmem [thread:$0]  %s179, 512, %s181, %s168, 128, 128, 8
        $region24: #{tpu_custom_call.1} parent=19 // pred_fallthru
          _
        // Predicated region
        $region25: #{tpu_custom_call.1} parent=19 // pred_check
          %p187 = pneg %p85
        $region26: #{tpu_custom_call.1} parent=19 // pred_check_branch
          %189 = sbr.rel (%p187) target = $region28
        $region27: #{tpu_custom_call.1} parent=19 // pred_region
          %s190 = sand.u32 %s75, 1
          %s191 = scalar_lea.sflag [#allocation6], %s190
          %s192 = sand.u32 %s75, 1
          %s193 = smul.addr %s192, 8
          %s194 = scalar_lea.vmem [#allocation5], %s193
          %s196 = ssub.s32 128, 128
          %197 = vsyncadd %s191, %s196
          %s198 = smul.addr %s27, 128
          %s199 = scalar_lea.hbm %s1, %s198
          %s201 = sshll.u32 %s194, 4
          %s202 = int_to_ptr.vmem [resolvable:$true] %s201
          %204 = dma.hbm_to_vmem [thread:$0]  %s199, 128, %s202, %s191
        $region28: #{tpu_custom_call.1} parent=19 // pred_fallthru
          _
      $region20: #{tpu_custom_call.1} parent=5 // pred_fallthru
        _
      %p205 = scmp.le.s32.totalorder 1, %s18
      %p206 = scmp.lt.s32.totalorder %s18, 9
      %p207 = pnand %p205, %p206
      %p208 = pneg %p207
      // Predicated region
      $region29: #{tpu_custom_call.1} parent=5 // pred_check
        _
      $region30: #{tpu_custom_call.1} parent=5 // pred_check_branch
        %210 = sbr.rel (%p207) target = $region32
      $region31: #{tpu_custom_call.1} parent=5 // pred_region
        %s211 = ssub.s32 %s18, 1
        %s212 = sand.u32 %s52, 1
        %s213 = scalar_lea.sflag [#allocation3], %s212
        %s214 = sand.u32 %s52, 1
        %s215 = smul.addr %s214, 32
        %s216 = scalar_lea.vmem [#allocation2], %s215
        // Predicated region
        $region33: #{tpu_custom_call.1} parent=31 // pred_check
          %p217 = pneg %p65
        $region34: #{tpu_custom_call.1} parent=31 // pred_check_branch
          %219 = sbr.rel (%p217) target = $region36
        $region35: #{tpu_custom_call.1} parent=31 // pred_region
          %220 = dma.done %s213, 512
        $region36: #{tpu_custom_call.1} parent=31 // pred_fallthru
          _
        %s221 = sand.u32 %s78, 1
        %s222 = scalar_lea.sflag [#allocation6], %s221
        %s223 = sand.u32 %s78, 1
        %s224 = smul.addr %s223, 8
        %s225 = scalar_lea.vmem [#allocation5], %s224
        // Predicated region
        $region37: #{tpu_custom_call.1} parent=31 // pred_check
          %p226 = pneg %p91
        $region38: #{tpu_custom_call.1} parent=31 // pred_check_branch
          %228 = sbr.rel (%p226) target = $region40
        $region39: #{tpu_custom_call.1} parent=31 // pred_region
          %229 = dma.done %s222, 128
        $region40: #{tpu_custom_call.1} parent=31 // pred_fallthru
          _
        %s230 = sand.u32 %s52, 1
        %s231 = scalar_lea.sflag [#allocation3], %s230
        %s232 = sand.u32 %s52, 1
        %s233 = smul.addr %s232, 32
        %s234 = scalar_lea.vmem [#allocation2], %s233
        %p235 = pneg %p65
        %p236 = pneg %p62
        %s237 = sand.u32 %s78, 1
        %s238 = scalar_lea.sflag [#allocation6], %s237
        %s239 = sand.u32 %s78, 1
        %s240 = smul.addr %s239, 8
        %s241 = scalar_lea.vmem [#allocation5], %s240
        %p242 = pneg %p91
        %p243 = pneg %p88
        %p244 = pneg %p112
        %p245 = pneg %p109
        %p246 = pneg %p142
        %p247 = pneg %p139
        %s248 = sand.u32 %s129, 1
        %s249 = scalar_lea.sflag [#allocation4], %s248
        %s250 = sand.u32 %s129, 1
        %s251 = smul.addr %s250, 32
        %s252 = scalar_lea.vmem [#allocation7], %s251
        %s253 = smul.u32 4, %s29
        %s254 = smul.u32 4, %s29
        %v255 = vld [vmem:[%s216] sm:$0xff]
        %v256 = vld [vmem:[%s216 + $0x8] sm:$0xff]
        %v257 = vld [vmem:[%s216 + $0x10] sm:$0xff]
        %v258 = vld [vmem:[%s216 + $0x18] sm:$0xff]
        %v259 = vld [vmem:[%s225] sm:$0xff]
        %v260 = vld [vmem:[%s2] sm:$0x1]
        %v262 = vlaneseq
        %v263 = vshrl.u32 %v262, 7
        %v264 = vsub.s32 0, %v263
        %v265 = vrot.slane %v260, %v264
        %vm267 = vcmask 64512
        %v269 = vsel %vm267, %v255, 0
        %v272 = vsel %vm267, %v256, 0
        %v275 = vsel %vm267, %v257, 0
        %v278 = vsel %vm267, %v258, 0
        %280 = vmatprep.subr.mxu0 0.0
        %281 = vmatpush1.msra.mxu0 %v259
        %282 = vmatprep.subr.mxu0 0.0
        %283 = vmatpush1.msra.mxu0 0.0
        %284 = vmatprep.subr.mxu0 0.0
        %285 = vmatpush1.msra.mxu0 0.0
        %286 = vmatprep.subr.mxu0 0.0
        %287 = vmatpush1.msra.mxu0 0.0
        %288 = vmatprep.subr.mxu0 0.0
        %289 = vmatpush1.msra.mxu0 0.0
        %290 = vmatprep.subr.mxu0 0.0
        %291 = vmatpush1.msra.mxu0 0.0
        %292 = vmatprep.subr.mxu0 0.0
        %293 = vmatpush1.msra.mxu0 0.0
        %294 = vmatprep.subr.mxu0 0.0
        %295 = vmatpush1.msra.mxu0 0.0
        %296 = vmatprep.subr.mxu0 0.0
        %297 = vmatpush1.msra.mxu0 0.0
        %298 = vmatprep.subr.mxu0 0.0
        %299 = vmatpush1.msra.mxu0 0.0
        %300 = vmatprep.subr.mxu0 0.0
        %301 = vmatpush1.msra.mxu0 0.0
        %302 = vmatprep.subr.mxu0 0.0
        %303 = vmatpush1.msra.mxu0 0.0
        %304 = vmatprep.subr.mxu0 0.0
        %305 = vmatpush1.msra.mxu0 0.0
        %306 = vmatprep.subr.mxu0 0.0
        %307 = vmatpush1.msra.mxu0 0.0
        %308 = vmatprep.subr.mxu0 0.0
        %309 = vmatpush1.msra.mxu0 0.0
        %310 = vmatprep.subr.mxu0 0.0
        %311 = vmatpush1.msra.mxu0 0.0
        %312 = vmatprep.subr.mxu0 0.0
        %313 = vmatpush1.msra.mxu0 0.0
        %314 = vmatprep.subr.mxu0 0.0
        %315 = vmatpush1.msra.mxu0 0.0
        %316 = vmatprep.subr.mxu0 0.0
        %317 = vmatpush1.msra.mxu0 0.0
        %318 = vmatprep.subr.mxu0 0.0
        %319 = vmatpush1.msra.mxu0 0.0
        %320 = vmatprep.subr.mxu0 0.0
        %321 = vmatpush1.msra.mxu0 0.0
        %322 = vmatprep.subr.mxu0 0.0
        %323 = vmatpush1.msra.mxu0 0.0
        %324 = vmatprep.subr.mxu0 0.0
        %325 = vmatpush1.msra.mxu0 0.0
        %326 = vmatprep.subr.mxu0 0.0
        %327 = vmatpush1.msra.mxu0 0.0
        %328 = vmatprep.subr.mxu0 0.0
        %329 = vmatpush1.msra.mxu0 0.0
        %330 = vmatprep.subr.mxu0 0.0
        %331 = vmatpush1.msra.mxu0 0.0
        %332 = vmatprep.subr.mxu0 0.0
        %333 = vmatpush1.msra.mxu0 0.0
        %334 = vmatprep.subr.mxu0 0.0
        %335 = vmatpush1.msra.mxu0 0.0
        %336 = vmatprep.subr.mxu0 0.0
        %337 = vmatpush1.msra.mxu0 0.0
        %338 = vmatprep.subr.mxu0 0.0
        %339 = vmatpush1.msra.mxu0 0.0
        %340 = vmatprep.subr.mxu0 0.0
        %341 = vmatpush1.msra.mxu0 0.0
        %342 = vmatprep.subr.mxu0 0.0
        %343 = vmatpush1.msra.mxu0 0.0
        %344 = vmatprep.mubr.f32.mxu0 0.0
        %345 = vmatmul.mubr.f32.gmra.mrb[0].mxu0 %v269
        %v346 = vpop.f32.mrb[0].mxu0
        %v347 = vadd.f32 %v265, %v346
        %v348 = vpop.f32.mrb[0].mxu0
        %349 = vmatprep.mubr.f32.mxu0 0.0
        %350 = vmatmul.mubr.f32.gmra.mrb[0].mxu0 %v272
        %v351 = vpop.f32.mrb[0].mxu0
        %v352 = vadd.f32 %v265, %v351
        %v353 = vpop.f32.mrb[0].mxu0
        %354 = vmatprep.mubr.f32.mxu0 0.0
        %355 = vmatmul.mubr.f32.gmra.mrb[0].mxu0 %v275
        %v356 = vpop.f32.mrb[0].mxu0
        %v357 = vadd.f32 %v265, %v356
        %v358 = vpop.f32.mrb[0].mxu0
        %359 = vmatprep.mubr.f32.mxu0 0.0
        %360 = vmatmul.mubr.f32.gmra.mrb[0].mxu0 %v278
        %v361 = vpop.f32.mrb[0].mxu0
        %v362 = vadd.f32 %v265, %v361
        %v363 = vpop.f32.mrb[0].mxu0
        %364 = vdwg.mxu0
        %365 = vst.msk [vmem:[%s252] sm:$0xff] %vm267, %v347
        %366 = vst.msk [vmem:[%s252 + $0x8] sm:$0xff] %vm267, %v352
        %367 = vst.msk [vmem:[%s252 + $0x10] sm:$0xff] %vm267, %v357
        %368 = vst.msk [vmem:[%s252 + $0x18] sm:$0xff] %vm267, %v362
        %s369 = sand.u32 %s129, 1
        %s370 = scalar_lea.sflag [#allocation4], %s369
        %s371 = sand.u32 %s129, 1
        %s372 = smul.addr %s371, 32
        %s373 = scalar_lea.vmem [#allocation7], %s372
        // Predicated region
        $region41: #{tpu_custom_call.1} parent=31 // pred_check
          %p374 = pneg %p139
        $region42: #{tpu_custom_call.1} parent=31 // pred_check_branch
          %376 = sbr.rel (%p374) target = $region44
        $region43: #{tpu_custom_call.1} parent=31 // pred_region
          %s377 = smul.u32 4, %s29
          %s379 = ssub.s32 512, 512
          %380 = vsyncadd %s370, %s379
          %s381 = smul.addr %s377, 2
          %s382 = sadd.s32 %s30, %s381
          %s383 = smul.addr %s28, 16
          %s384 = sadd.s32 %s382, %s383
          %s385 = smul.addr %s384, 128
          %s386 = scalar_lea.hbm %s3, %s385
          %s387 = sshll.u32 %s373, 4
          %s388 = int_to_ptr.vmem [resolvable:$true] %s387
          %393 = dma.vmem_to_hbm [thread:$0]  %s388, 512, %s386, %s370, 128, 256, 8
        $region44: #{tpu_custom_call.1} parent=31 // pred_fallthru
          _
      $region32: #{tpu_custom_call.1} parent=5 // pred_fallthru
        _
      %p394 = scmp.le.s32.totalorder 2, %s18
      // Predicated region
      $region45: #{tpu_custom_call.1} parent=5 // pred_check
        %p395 = pneg %p394
      $region46: #{tpu_custom_call.1} parent=5 // pred_check_branch
        %397 = sbr.rel (%p395) target = $region48
      $region47: #{tpu_custom_call.1} parent=5 // pred_region
        %s398 = ssub.s32 %s18, 2
        // Predicated region
        $region49: #{tpu_custom_call.1} parent=47 // pred_check
          %p399 = pneg %p145
        $region50: #{tpu_custom_call.1} parent=47 // pred_check_branch
          %401 = sbr.rel (%p399) target = $region52
        $region51: #{tpu_custom_call.1} parent=47 // pred_region
          %s402 = sand.u32 %s130, 1
          %s403 = scalar_lea.sflag [#allocation4], %s402
          %s404 = sand.u32 %s130, 1
          %s405 = smul.addr %s404, 32
          %s406 = scalar_lea.vmem [#allocation7], %s405
          %407 = dma.done %s403, 512
        $region52: #{tpu_custom_call.1} parent=47 // pred_fallthru
          _
      $region48: #{tpu_custom_call.1} parent=5 // pred_fallthru
        _
    $region6: #{tpu_custom_call.1} parent=1 // loop_footer
      %s22 = sadd.s32 1, %s18
    $region7: #{tpu_custom_call.1} parent=1 // loop_footer_branch
      %17 = sbr.rel target = $region3
    $region8: #{tpu_custom_call.1} parent=1 // loop_exit
      _
    %408 = vsyncpa [#allocation3], 1
    %s409 = scalar_lea.sflag [#allocation3], 1
    %410 = vsyncpa %s409, 1
    %411 = vsyncpa [#allocation6], 1
    %s412 = scalar_lea.sflag [#allocation6], 1
    %413 = vsyncpa %s412, 1
    %414 = vsyncpa [#allocation4], 1
    %s415 = scalar_lea.sflag [#allocation4], 1
    %416 = vsyncpa %s415, 1

</llo_original>
